<compile_context>
chip_gen: v7x
topology: tpu7x:2x2x1
jax: 0.10.0
libtpu: 0.0.40
codegen_flags: <defaults>
</compile_context>

<pallas_src>
import jax
import jax.numpy as jnp
from jax import lax
from jax.experimental import pallas as pl
from jax.experimental.pallas import tpu as pltpu


def _make_transition_kernel(pool_in_bf16):
    def kernel(x_ref, w_ref, b_ref, o_ref):
        # x_ref: (TR, Wh, 2*Cin) bf16 -- rows = flattened N*H, W-pairs on the lane axis
        # w_ref: (Cin, Cout)     bf16 -- 1x1 conv weight with BN scale and 1/4 folded in
        # b_ref: (1, Cout)       f32  -- BN bias pushed through the conv
        # o_ref: (TR//2, Wh, Cout) bf16
        x = x_ref[...]
        if not pool_in_bf16:                      # v5e/v4: no bf16 VALU
            x = x.astype(jnp.float32)
        tr, wh, c2 = x.shape
        cin = c2 // 2

        # --- 2x2 pool-SUM before the conv (the 1/4 scale lives in w_ref) ---
        # W-pairs are adjacent on the lane axis -> two contiguous lane slices.
        xw = x[:, :, :cin] + x[:, :, cin:]        # (TR, Wh, Cin)
        # H-pairs sit on the leading (slab) axis -> free reshape + slab add.
        xh = xw.reshape(tr // 2, 2, wh, cin)
        xs = (xh[:, 0] + xh[:, 1]).astype(jnp.bfloat16)   # (TR//2, Wh, Cin)

        # --- 1x1 conv == channel contraction on the MXU (bf16 in, f32 accumulate),
        #     no sublane reshapes, result stored directly. ---
        y = lax.dot_general(
            xs, w_ref[...],
            dimension_numbers=(((2,), (0,)), ((), ())),
            preferred_element_type=jnp.float32,
        )                                          # (TR//2, Wh, Cout)
        o_ref[...] = (y + b_ref[...]).astype(o_ref.dtype)

    return kernel


def _tpu_generation():
    try:
        kind = jax.devices()[0].device_kind.lower()
    except Exception:
        return "unknown"
    for g in ("v7", "v6", "v5", "v4"):
        if g in kind:
            return g
    return "unknown"


def _gen_config():
    gen = _tpu_generation()
    if gen == "v7":
        # 64 MiB physical VMEM shared concerns: smaller slabs, tighter scoped limit.
        return dict(target_bytes=3 << 20, vmem_limit=48 << 20, pool_in_bf16=True)
    if gen == "v6":
        return dict(target_bytes=6 << 20, vmem_limit=96 << 20, pool_in_bf16=True)
    if gen in ("v5", "v4"):
        # No bf16 VALU: pool in f32; keep slabs a bit smaller for the f32 temps.
        return dict(target_bytes=4 << 20, vmem_limit=80 << 20, pool_in_bf16=False)
    # Unknown backend: conservative settings that are known to run clean.
    return dict(target_bytes=2 << 20, vmem_limit=32 << 20, pool_in_bf16=True)


def _pick_tile_rows(N, H, Wh, Cin, target_bytes):
    """Rows (of the flattened N*H axis) per grid step.

    Tiles are either an even divisor of H (sub-image) or a whole number of images
    (multiple of H), so every tile contains complete, aligned 2x2 pooling windows.
    Prefers >= 2 grid steps so both v7x TensorCores get work.
    """
    R = N * H
    row_bytes = Wh * (2 * Cin) * 2                     # bf16 input bytes per row
    cands = {t for t in range(2, H + 1, 2) if H % t == 0}
    cands |= {k * H for k in range(1, N + 1) if N % k == 0}
    cands = sorted(cands)
    fitting = [t for t in cands if t * row_bytes <= target_bytes] or [cands[0]]
    multi = [t for t in fitting if R // t >= 2]
    return max(multi or fitting)


def transition_forward_nhwc(x_nhwc, gamma, beta, running_mean, running_var, conv_w,
                            eps=1e-5):
    """Fused eval-mode BN -> 1x1 conv -> AvgPool2d(2,2), NHWC in / NHWC bf16 out.

    x_nhwc: (N, H, W, Cin).  conv_w: (Cout, Cin, 1, 1) PyTorch OIHW.
    Returns (N, H//2, W//2, Cout) bf16.
    """
    N, H, W, Cin = x_nhwc.shape
    Cout = conv_w.shape[0]
    assert H % 2 == 0 and W % 2 == 0, "AvgPool2d(2,2) path assumes even spatial dims"
    cfg = _gen_config()

    # Fold BN (running stats) and the 2x2 average (1/4) into the 1x1 conv:
    #   pool(x*s + b) @ W == sum4(x) @ (0.25*s*W) + b @ W   (exact by linearity).
    scale = (gamma / jnp.sqrt(running_var + eps)).astype(jnp.float32)        # (Cin,)
    bias_bn = (beta - running_mean * scale).astype(jnp.float32)              # (Cin,)
    w_mat = conv_w[:, :, 0, 0].T.astype(jnp.float32)                         # (Cin, Cout)
    w_folded = (0.25 * scale[:, None] * w_mat).astype(jnp.bfloat16)          # (Cin, Cout)
    b_folded = (bias_bn @ w_mat).reshape(1, Cout).astype(jnp.float32)        # (1, Cout)

    # Fold W-pairs into the lane axis and flatten N*H into one row axis
    # (both are free row-major reshapes).
    Wh = W // 2
    R = N * H
    x_rows = x_nhwc.astype(jnp.bfloat16).reshape(R, Wh, 2 * Cin)

    TR = _pick_tile_rows(N, H, Wh, Cin, cfg["target_bytes"])
    grid = (R // TR,)

    out_rows = pl.pallas_call(
        _make_transition_kernel(cfg["pool_in_bf16"]),
        out_shape=jax.ShapeDtypeStruct((R // 2, Wh, Cout), jnp.bfloat16),
        grid_spec=pltpu.PrefetchScalarGridSpec(
            num_scalar_prefetch=0,
            grid=grid,
            in_specs=[
                pl.BlockSpec((TR, Wh, 2 * Cin), lambda i: (i, 0, 0)),
                pl.BlockSpec((Cin, Cout), lambda i: (0, 0)),   # VMEM-resident weight
                pl.BlockSpec((1, Cout), lambda i: (0, 0)),     # VMEM-resident bias
            ],
            out_specs=pl.BlockSpec((TR // 2, Wh, Cout), lambda i: (i, 0, 0)),
        ),
        compiler_params=pltpu.CompilerParams(
            dimension_semantics=("parallel",),
            vmem_limit_bytes=cfg["vmem_limit"],
        ),
    )(x_rows, w_folded, b_folded)

    return out_rows.reshape(N, H // 2, Wh, Cout)


def transition_forward(x_nchw, gamma, beta, running_mean, running_var, conv_w, eps=1e-5):
    """PyTorch-interface wrapper: (N, Cin, H, W) -> (N, Cout, H//2, W//2) bf16."""
    x_nhwc = jnp.transpose(x_nchw, (0, 2, 3, 1))
    out_nhwc = transition_forward_nhwc(x_nhwc, gamma, beta, running_mean, running_var,
                                       conv_w, eps=eps)
    return jnp.transpose(out_nhwc, (0, 3, 1, 2))


def _reference(x_nchw, gamma, beta, running_mean, running_var, conv_w, eps=1e-5):
    # Pure-JAX f32 reference mirroring the PyTorch module (eval-mode BN).
    inv = gamma / jnp.sqrt(running_var + eps)
    xn = (x_nchw - running_mean[None, :, None, None]) * inv[None, :, None, None] \
         + beta[None, :, None, None]
    w = conv_w[:, :, 0, 0]                                                   # (Cout, Cin)
    y = jnp.einsum('nchw,oc->nohw', xn, w)
    Nn, Co, H, W = y.shape
    return y.reshape(Nn, Co, H // 2, 2, W // 2, 2).mean(axis=(3, 5))


if __name__ == "__main__":
    # Small deterministic example (DenseNet transition halves the channel count).
    N, Cin, Cout, H, W = 2, 8, 4, 16, 16
    key = jax.random.PRNGKey(0)
    k_x, k_g, k_b, k_m, k_v, k_w = jax.random.split(key, 6)

    x = jax.random.normal(k_x, (N, Cin, H, W), dtype=jnp.float32)
    gamma = jax.random.uniform(k_g, (Cin,), minval=0.5, maxval=1.5, dtype=jnp.float32)
    beta = 0.1 * jax.random.normal(k_b, (Cin,), dtype=jnp.float32)
    running_mean = 0.1 * jax.random.normal(k_m, (Cin,), dtype=jnp.float32)
    running_var = jax.random.uniform(k_v, (Cin,), minval=0.5, maxval=1.5, dtype=jnp.float32)
    conv_w = 0.2 * jax.random.normal(k_w, (Cout, Cin, 1, 1), dtype=jnp.float32)

    out = transition_forward(x, gamma, beta, running_mean, running_var, conv_w)
    out = jax.block_until_ready(out)

    ref = _reference(x, gamma, beta, running_mean, running_var, conv_w)
    assert out.shape == (N, Cout, H // 2, W // 2)
    # bf16 activations / weights / output -> allow bf16-level rounding vs f32 reference.
    assert jnp.allclose(out.astype(jnp.float32), ref, atol=2e-2, rtol=2e-2)

    print("KERNEL_OK")
</pallas_src>

<mosaic_0001>
module attributes {stable_mosaic.version = 11 : i64} {
  func.func @kernel(%arg0: i32, %arg1: memref<16x8x16xbf16, #tpu.memory_space<vmem>>, %arg2: memref<8x4xbf16, #tpu.memory_space<vmem>>, %arg3: memref<1x4xf32, #tpu.memory_space<vmem>>, %arg4: memref<8x8x4xbf16, #tpu.memory_space<vmem>>) attributes {dimension_semantics = [#tpu.dimension_semantics<parallel>], iteration_bounds = array<i64: 2>, scalar_prefetch = 0 : i64, scratch_operands = 0 : i64, tpu.core_type = #tpu.core_type<tc>, window_params = [{transform_indices = @transform_0, window_bounds = array<i64: 16, 8, 16>}, {pipeline_mode = #tpu.pipeline_mode<synchronous>, transform_indices = @transform_1, window_bounds = array<i64: 8, 4>}, {pipeline_mode = #tpu.pipeline_mode<synchronous>, transform_indices = @transform_2, window_bounds = array<i64: 1, 4>}, {transform_indices = @transform_3, window_bounds = array<i64: 8, 8, 4>}]} {
    %c0 = arith.constant 0 : index
    %c0_0 = arith.constant 0 : index
    %c0_1 = arith.constant 0 : index
    %0 = vector.load %arg1[%c0, %c0_0, %c0_1] : memref<16x8x16xbf16, #tpu.memory_space<vmem>>, vector<16x8x16xbf16>
    %1 = vector.extract_strided_slice %0 {offsets = [0, 0, 0], sizes = [16, 8, 8], strides = [1, 1, 1]} : vector<16x8x16xbf16> to vector<16x8x8xbf16>
    %2 = vector.extract_strided_slice %0 {offsets = [0, 0, 8], sizes = [16, 8, 8], strides = [1, 1, 1]} : vector<16x8x16xbf16> to vector<16x8x8xbf16>
    %3 = arith.addf %1, %2 : vector<16x8x8xbf16>
    %4 = vector.shape_cast %3 : vector<16x8x8xbf16> to vector<8x2x8x8xbf16>
    %5 = vector.extract_strided_slice %4 {offsets = [0, 0, 0, 0], sizes = [8, 1, 8, 8], strides = [1, 1, 1, 1]} : vector<8x2x8x8xbf16> to vector<8x1x8x8xbf16>
    %6 = vector.shape_cast %5 : vector<8x1x8x8xbf16> to vector<8x8x8xbf16>
    %7 = vector.extract_strided_slice %4 {offsets = [0, 1, 0, 0], sizes = [8, 1, 8, 8], strides = [1, 1, 1, 1]} : vector<8x2x8x8xbf16> to vector<8x1x8x8xbf16>
    %8 = vector.shape_cast %7 : vector<8x1x8x8xbf16> to vector<8x8x8xbf16>
    %9 = arith.addf %6, %8 : vector<8x8x8xbf16>
    %c0_2 = arith.constant 0 : index
    %c0_3 = arith.constant 0 : index
    %10 = vector.load %arg2[%c0_2, %c0_3] : memref<8x4xbf16, #tpu.memory_space<vmem>>, vector<8x4xbf16>
    %cst = arith.constant dense<0.000000e+00> : vector<8x8x4xf32>
    %11 = tpu.matmul %9, %10, %cst {dimension_numbers = #tpu.dot_dimension_numbers<[2], [0], [0, 1], [1], [0, 0, 0, 1, 1, 1], [], []>} : vector<8x8x8xbf16>, vector<8x4xbf16>, vector<8x8x4xf32> -> vector<8x8x4xf32>
    %c0_4 = arith.constant 0 : index
    %c0_5 = arith.constant 0 : index
    %12 = vector.load %arg3[%c0_4, %c0_5] : memref<1x4xf32, #tpu.memory_space<vmem>>, vector<1x4xf32>
    %13 = vector.shape_cast %12 : vector<1x4xf32> to vector<1x1x4xf32>
    %14 = vector.broadcast %13 : vector<1x1x4xf32> to vector<8x8x4xf32>
    %15 = arith.addf %11, %14 : vector<8x8x4xf32>
    %16 = arith.truncf %15 : vector<8x8x4xf32> to vector<8x8x4xbf16>
    %c0_6 = arith.constant 0 : index
    %c0_7 = arith.constant 0 : index
    %c0_8 = arith.constant 0 : index
    %17 = vector.load %arg4[%c0_6, %c0_7, %c0_8] : memref<8x8x4xbf16, #tpu.memory_space<vmem>>, vector<8x8x4xbf16>
    tpu.vector_store %arg4[%c0_6, %c0_7, %c0_8], %16 {strides = array<i32>} : memref<8x8x4xbf16, #tpu.memory_space<vmem>>, vector<8x8x4xbf16>,
    return
  }
  func.func @transform_0(%arg0: i32) -> (i32, i32, i32) {
    %c0_i32 = arith.constant 0 : i32
    %c0_i32_0 = arith.constant 0 : i32
    %c0_i32_1 = arith.constant 0 : i32
    return %arg0, %c0_i32, %c0_i32_0 : i32, i32, i32
  }
  func.func @transform_1(%arg0: i32) -> (i32, i32) {
    %c0_i32 = arith.constant 0 : i32
    %c0_i32_0 = arith.constant 0 : i32
    %c0_i32_1 = arith.constant 0 : i32
    return %c0_i32, %c0_i32_0 : i32, i32
  }
  func.func @transform_2(%arg0: i32) -> (i32, i32) {
    %c0_i32 = arith.constant 0 : i32
    %c0_i32_0 = arith.constant 0 : i32
    %c0_i32_1 = arith.constant 0 : i32
    return %c0_i32, %c0_i32_0 : i32, i32
  }
  func.func @transform_3(%arg0: i32) -> (i32, i32, i32) {
    %c0_i32 = arith.constant 0 : i32
    %c0_i32_0 = arith.constant 0 : i32
    %c0_i32_1 = arith.constant 0 : i32
    return %arg0, %c0_i32, %c0_i32_0 : i32, i32, i32
  }
}

</mosaic_0001>

<llo_original>
// kernel: tpu_custom_call.1
$region0: #{tpu_custom_call.1}
  #allocation0 [shape = 'u32[]', space=smem, size = 0x4, offset = 0x4, fixed_abs, tag = 'smem constant byte address 0x4 - core index']
  #allocation1 [shape = 'u32[144,128]{1,0:T(1,128)}', space=vmem, size = 0x12000, scoped, tag = 'internal scratch']
  %s0 = inlined_call_operand.vmem [shape: bf16[32,8,16], index: 0, kind: input, shape index: {}]
  %s1 = inlined_call_operand.vmem [shape: bf16[8,4], index: 1, kind: input, shape index: {}]
  %s2 = inlined_call_operand.vmem [shape: f32[1,4], index: 2, kind: input, shape index: {}]
  %s3 = inlined_call_operand.vmem [shape: bf16[16,8,4], index: 3, kind: output, shape index: {}]
  %s4 = sld [smem:[#allocation0]]
  $region45: #{tpu_custom_call.1} parent=0
    _
  %s6 = ssub.s32 1, %s4
  %s7 = scalar_select 0, %s6, %s4
  loop: start=0, step=1, limit=4
  $region2: #{tpu_custom_call.1} parent=0 // loop_pre_header
    _
  $region3: #{tpu_custom_call.1} parent=0 // loop_header
    %s9 = sphi 0, %s13
    %p10 = scmp.ge.s32.totalorder %s9, 4
    %s19 = sphi 0, %s21
    %s22 = sphi 0, %s19
    %s23 = sphi 0, %s22
    %s39 = sphi 0, %s23
    %s43 = sphi 0, %s43
    %s45 = sphi 0, %s43
    %s46 = sphi 0, %s45
    %s60 = sphi 0, %s46
    %s64 = sphi 0, %s64
    %s66 = sphi 0, %s64
    %s67 = sphi 0, %s66
    %s81 = sphi 0, %s67
    %s87 = sphi 0, %s89
    %s90 = sphi 0, %s87
    %s91 = sphi 0, %s90
    %s107 = sphi 0, %s91
  $region4: #{tpu_custom_call.1} parent=0 // loop_header_branch
    %12 = sbr.rel (%p10) target = $region8
  $region5: #{tpu_custom_call.1} parent=0 // loop_body
    %s14 = ssub.s32 %s9, 1
    %s15 = ssub.s32 %s9, 2
    %s16 = sadd.s32 %s9, 1
    %s17 = ssub.s32 %s9, %s16
    %p18 = scmp.eq.s32.totalorder %s17, 0
    %s20 = sadd.s32 %s19, 1
    %s21 = scalar_select %p18, %s19, %s20
    %p24 = pneg %p18
    %p25 = scmp.eq.s32.totalorder %s9, 1
    %p26 = por %p24, %p25
    %p27 = scmp.ne.s32.totalorder %s19, %s22
    %p28 = scmp.eq.s32.totalorder %s9, 0
    %p29 = por %p27, %p28
    %p30 = scmp.ne.s32.totalorder %s19, %s22
    %p31 = scmp.eq.s32.totalorder %s14, 1
    %p32 = por %p30, %p31
    %p33 = scmp.ne.s32.totalorder %s22, %s23
    %p34 = scmp.eq.s32.totalorder %s14, 0
    %p35 = por %p33, %p34
    %p36 = scmp.ne.s32.totalorder %s22, %s23
    %p37 = scmp.eq.s32.totalorder %s15, 1
    %p38 = por %p36, %p37
    %p40 = scmp.ne.s32.totalorder %s23, %s39
    %p41 = scmp.eq.s32.totalorder %s15, 0
    %p42 = por %p40, %p41
    %s44 = sadd.s32 %s43, 1
    %p47 = scmp.eq.s32.totalorder %s9, 1
    %p48 = scmp.ne.s32.totalorder %s43, %s45
    %p49 = scmp.eq.s32.totalorder %s9, 0
    %p50 = por %p48, %p49
    %p51 = scmp.ne.s32.totalorder %s43, %s45
    %p52 = scmp.eq.s32.totalorder %s14, 1
    %p53 = por %p51, %p52
    %p54 = scmp.ne.s32.totalorder %s45, %s46
    %p55 = scmp.eq.s32.totalorder %s14, 0
    %p56 = por %p54, %p55
    %p57 = scmp.ne.s32.totalorder %s45, %s46
    %p58 = scmp.eq.s32.totalorder %s15, 1
    %p59 = por %p57, %p58
    %p61 = scmp.ne.s32.totalorder %s46, %s60
    %p62 = scmp.eq.s32.totalorder %s15, 0
    %p63 = por %p61, %p62
    %s65 = sadd.s32 %s64, 1
    %p68 = scmp.eq.s32.totalorder %s9, 1
    %p69 = scmp.ne.s32.totalorder %s64, %s66
    %p70 = scmp.eq.s32.totalorder %s9, 0
    %p71 = por %p69, %p70
    %p72 = scmp.ne.s32.totalorder %s64, %s66
    %p73 = scmp.eq.s32.totalorder %s14, 1
    %p74 = por %p72, %p73
    %p75 = scmp.ne.s32.totalorder %s66, %s67
    %p76 = scmp.eq.s32.totalorder %s14, 0
    %p77 = por %p75, %p76
    %p78 = scmp.ne.s32.totalorder %s66, %s67
    %p79 = scmp.eq.s32.totalorder %s15, 1
    %p80 = por %p78, %p79
    %p82 = scmp.ne.s32.totalorder %s67, %s81
    %p83 = scmp.eq.s32.totalorder %s15, 0
    %p84 = por %p82, %p83
    %s85 = ssub.s32 %s9, %s16
    %p86 = scmp.eq.s32.totalorder %s85, 0
    %s88 = sadd.s32 %s87, 1
    %s89 = scalar_select %p86, %s87, %s88
    %p92 = pneg %p86
    %p93 = scmp.eq.s32.totalorder %s9, 1
    %p94 = por %p92, %p93
    %p95 = scmp.ne.s32.totalorder %s87, %s90
    %p96 = scmp.eq.s32.totalorder %s9, 0
    %p97 = por %p95, %p96
    %p98 = scmp.ne.s32.totalorder %s87, %s90
    %p99 = scmp.eq.s32.totalorder %s14, 1
    %p100 = por %p98, %p99
    %p101 = scmp.ne.s32.totalorder %s90, %s91
    %p102 = scmp.eq.s32.totalorder %s14, 0
    %p103 = por %p101, %p102
    %p104 = scmp.ne.s32.totalorder %s90, %s91
    %p105 = scmp.eq.s32.totalorder %s15, 1
    %p106 = por %p104, %p105
    %p108 = scmp.ne.s32.totalorder %s91, %s107
    %p109 = scmp.eq.s32.totalorder %s15, 0
    %p110 = por %p108, %p109
    %p111 = scmp.le.s32.totalorder 1, %s9
    %p112 = scmp.lt.s32.totalorder %s9, 3
    %p113 = pnand %p111, %p112
    %p114 = pneg %p113
    // Predicated region
    $region9: #{tpu_custom_call.1} parent=5 // pred_check
      _
    $region10: #{tpu_custom_call.1} parent=5 // pred_check_branch
      %116 = sbr.rel (%p113) target = $region12
    $region11: #{tpu_custom_call.1} parent=5 // pred_region
      %s117 = ssub.s32 %s9, 1
      // Predicated region
      $region13: #{tpu_custom_call.1} parent=11 // pred_check
        %p118 = pneg %p56
      $region14: #{tpu_custom_call.1} parent=11 // pred_check_branch
        %120 = sbr.rel (%p118) target = $region16
      $region15: #{tpu_custom_call.1} parent=11 // pred_region
        _
      $region16: #{tpu_custom_call.1} parent=11 // pred_fallthru
        _
      // Predicated region
      $region17: #{tpu_custom_call.1} parent=11 // pred_check
        %p121 = pneg %p77
      $region18: #{tpu_custom_call.1} parent=11 // pred_check_branch
        %123 = sbr.rel (%p121) target = $region20
      $region19: #{tpu_custom_call.1} parent=11 // pred_region
        _
      $region20: #{tpu_custom_call.1} parent=11 // pred_fallthru
        _
    $region12: #{tpu_custom_call.1} parent=5 // pred_fallthru
      _
    %p124 = scmp.lt.s32.totalorder %s9, 2
    // Predicated region
    $region21: #{tpu_custom_call.1} parent=5 // pred_check
      %p125 = pneg %p124
    $region22: #{tpu_custom_call.1} parent=5 // pred_check_branch
      %127 = sbr.rel (%p125) target = $region24
    $region23: #{tpu_custom_call.1} parent=5 // pred_region
      // Predicated region
      $region25: #{tpu_custom_call.1} parent=23 // pred_check
        %p128 = pneg %p29
      $region26: #{tpu_custom_call.1} parent=23 // pred_check_branch
        %130 = sbr.rel (%p128) target = $region28
      $region27: #{tpu_custom_call.1} parent=23 // pred_region
        %s131 = smul.u32 16, %s9
        %p132 = scmp.lt.s32.totalorder %s131, 31
        %s133 = scalar_select %p132, %s131, 31
        %s134 = smul.addr %s133, 4
        %s135 = scalar_lea.vmem %s0, %s134
        %s136 = smul.u32 16, %s9
      $region28: #{tpu_custom_call.1} parent=23 // pred_fallthru
        _
    $region24: #{tpu_custom_call.1} parent=5 // pred_fallthru
      _
    %p137 = scmp.le.s32.totalorder 1, %s9
    %p138 = scmp.lt.s32.totalorder %s9, 3
    %p139 = pnand %p137, %p138
    %p140 = pneg %p139
    // Predicated region
    $region29: #{tpu_custom_call.1} parent=5 // pred_check
      _
    $region30: #{tpu_custom_call.1} parent=5 // pred_check_branch
      %142 = sbr.rel (%p139) target = $region32
    $region31: #{tpu_custom_call.1} parent=5 // pred_region
      %s143 = ssub.s32 %s9, 1
      %s144 = smul.u32 16, %s14
      %p145 = scmp.lt.s32.totalorder %s144, 31
      %s146 = scalar_select %p145, %s144, 31
      %s147 = smul.addr %s146, 4
      %s148 = scalar_lea.vmem %s0, %s147
      %p149 = pneg %p35
      %p150 = pneg %p32
      %p151 = pneg %p56
      %p152 = pneg %p53
      %p153 = pneg %p77
      %p154 = pneg %p74
      %p155 = pneg %p103
      %p156 = pneg %p100
      %s157 = smul.u32 8, %s14
      %p158 = scmp.lt.s32.totalorder %s157, 15
      %s159 = scalar_select %p158, %s157, 15
      %s160 = smul.addr %s159, 4
      %s161 = scalar_lea.vmem %s3, %s160
      %s162 = smul.u32 16, %s14
      %p163 = scmp.lt.s32.totalorder %s162, 31
      %s164 = scalar_select %p163, %s162, 31
      %s165 = smul.addr %s164, 4
      %s166 = scalar_lea.vmem %s0, %s165
      %s167 = smul.u32 16, %s14
      %s168 = smul.u32 8, %s14
      %p169 = scmp.lt.s32.totalorder %s168, 15
      %s170 = scalar_select %p169, %s168, 15
      %s171 = smul.addr %s170, 4
      %s172 = scalar_lea.vmem %s3, %s171
      %s173 = smul.u32 8, %s14
      %v175 = vld [vmem:[%s166] sm:$0xf]
      %v176 = vld [vmem:[%s166 + $0x4] sm:$0xf]
      %v177 = vld [vmem:[%s166 + $0x8] sm:$0xf]
      %v178 = vld [vmem:[%s166 + $0xc] sm:$0xf]
      %v179 = vld [vmem:[%s166 + $0x10] sm:$0xf]
      %v180 = vld [vmem:[%s166 + $0x14] sm:$0xf]
      %v181 = vld [vmem:[%s166 + $0x18] sm:$0xf]
      %v182 = vld [vmem:[%s166 + $0x1c] sm:$0xf]
      %v183 = vld [vmem:[%s166 + $0x20] sm:$0xf]
      %v184 = vld [vmem:[%s166 + $0x24] sm:$0xf]
      %v185 = vld [vmem:[%s166 + $0x28] sm:$0xf]
      %v186 = vld [vmem:[%s166 + $0x2c] sm:$0xf]
      %v187 = vld [vmem:[%s166 + $0x30] sm:$0xf]
      %v188 = vld [vmem:[%s166 + $0x34] sm:$0xf]
      %v189 = vld [vmem:[%s166 + $0x38] sm:$0xf]
      %v190 = vld [vmem:[%s166 + $0x3c] sm:$0xf]
      %207 = vrot.lane.b32.xlu0 %v175, 120
      %v208 = vpop.permute.xlu0 %207
      %209 = vrot.lane.b32.xlu0 %v176, 120
      %v210 = vpop.permute.xlu0 %209
      %211 = vrot.lane.b32.xlu0 %v177, 120
      %v212 = vpop.permute.xlu0 %211
      %213 = vrot.lane.b32.xlu0 %v178, 120
      %v214 = vpop.permute.xlu0 %213
      %215 = vrot.lane.b32.xlu0 %v179, 120
      %v216 = vpop.permute.xlu0 %215
      %217 = vrot.lane.b32.xlu0 %v180, 120
      %v218 = vpop.permute.xlu0 %217
      %219 = vrot.lane.b32.xlu0 %v181, 120
      %v220 = vpop.permute.xlu0 %219
      %221 = vrot.lane.b32.xlu0 %v182, 120
      %v222 = vpop.permute.xlu0 %221
      %223 = vrot.lane.b32.xlu0 %v183, 120
      %v224 = vpop.permute.xlu0 %223
      %225 = vrot.lane.b32.xlu0 %v184, 120
      %v226 = vpop.permute.xlu0 %225
      %227 = vrot.lane.b32.xlu0 %v185, 120
      %v228 = vpop.permute.xlu0 %227
      %229 = vrot.lane.b32.xlu0 %v186, 120
      %v230 = vpop.permute.xlu0 %229
      %231 = vrot.lane.b32.xlu0 %v187, 120
      %v232 = vpop.permute.xlu0 %231
      %233 = vrot.lane.b32.xlu0 %v188, 120
      %v234 = vpop.permute.xlu0 %233
      %235 = vrot.lane.b32.xlu0 %v189, 120
      %v236 = vpop.permute.xlu0 %235
      %237 = vrot.lane.b32.xlu0 %v190, 120
      %v238 = vpop.permute.xlu0 %237
      %v255 = vadd.bf16 %v175, %v208
      %v256 = vadd.bf16 %v176, %v210
      %v257 = vadd.bf16 %v177, %v212
      %v258 = vadd.bf16 %v178, %v214
      %v259 = vadd.bf16 %v179, %v216
      %v260 = vadd.bf16 %v180, %v218
      %v261 = vadd.bf16 %v181, %v220
      %v262 = vadd.bf16 %v182, %v222
      %v263 = vadd.bf16 %v183, %v224
      %v264 = vadd.bf16 %v184, %v226
      %v265 = vadd.bf16 %v185, %v228
      %v266 = vadd.bf16 %v186, %v230
      %v267 = vadd.bf16 %v187, %v232
      %v268 = vadd.bf16 %v188, %v234
      %v269 = vadd.bf16 %v189, %v236
      %v270 = vadd.bf16 %v190, %v238
      %v271 = vadd.bf16 %v255, %v256
      %v272 = vadd.bf16 %v257, %v258
      %v273 = vadd.bf16 %v259, %v260
      %v274 = vadd.bf16 %v261, %v262
      %v275 = vadd.bf16 %v263, %v264
      %v276 = vadd.bf16 %v265, %v266
      %v277 = vadd.bf16 %v267, %v268
      %v278 = vadd.bf16 %v269, %v270
      %v279 = vld [vmem:[%s1] sm:$0xf]
      %v280 = vld [vmem:[%s2] sm:$0x1]
      %v282 = vlaneseq
      %v283 = vshrl.u32 %v282, 7
      %v284 = vsub.s32 0, %v283
      %v285 = vrot.slane %v280, %v284
      %v295 = vunpack.c.l.b16 %v271
      %v296 = vunpack.c.l.b16 %v272
      %v297 = vunpack.c.l.b16 %v273
      %v298 = vunpack.c.l.b16 %v274
      %v299 = vunpack.c.l.b16 %v275
      %v300 = vunpack.c.l.b16 %v276
      %v301 = vunpack.c.l.b16 %v277
      %v302 = vunpack.c.l.b16 %v278
      %v303 = vpack.c.b16 %v296, %v295
      %v304 = vpack.c.b16 %v298, %v297
      %v305 = vpack.c.b16 %v300, %v299
      %v306 = vpack.c.b16 %v302, %v301
      %vm307 = vcmask 64512
      %v309 = vsel %vm307, %v303, 0
      %v312 = vsel %vm307, %v304, 0
      %v315 = vsel %vm307, %v305, 0
      %v318 = vsel %vm307, %v306, 0
      %vm320 = vcmask 1043456
      %v322 = vsel %vm320, %v279, 0
      %324 = vmatprep.subr.bf16.mxu0 0
      %325 = vmatpush1.bf16.msra.mxu0 %v322
      %326 = vmatprep.subr.bf16.mxu0 0
      %327 = vmatpush1.bf16.msra.mxu0 0
      %328 = vmatprep.subr.bf16.mxu0 0
      %329 = vmatpush1.bf16.msra.mxu0 0
      %330 = vmatprep.subr.bf16.mxu0 0
      %331 = vmatpush1.bf16.msra.mxu0 0
      %332 = vmatprep.subr.bf16.mxu0 0
      %333 = vmatpush1.bf16.msra.mxu0 0
      %334 = vmatprep.subr.bf16.mxu0 0
      %335 = vmatpush1.bf16.msra.mxu0 0
      %336 = vmatprep.subr.bf16.mxu0 0
      %337 = vmatpush1.bf16.msra.mxu0 0
      %338 = vmatprep.subr.bf16.mxu0 0
      %339 = vmatpush1.bf16.msra.mxu0 0
      %340 = vmatprep.subr.bf16.mxu0 0
      %341 = vmatpush1.bf16.msra.mxu0 0
      %342 = vmatprep.subr.bf16.mxu0 0
      %343 = vmatpush1.bf16.msra.mxu0 0
      %344 = vmatprep.subr.bf16.mxu0 0
      %345 = vmatpush1.bf16.msra.mxu0 0
      %346 = vmatprep.subr.bf16.mxu0 0
      %347 = vmatpush1.bf16.msra.mxu0 0
      %348 = vmatprep.subr.bf16.mxu0 0
      %349 = vmatpush1.bf16.msra.mxu0 0
      %350 = vmatprep.subr.bf16.mxu0 0
      %351 = vmatpush1.bf16.msra.mxu0 0
      %352 = vmatprep.subr.bf16.mxu0 0
      %353 = vmatpush1.bf16.msra.mxu0 0
      %354 = vmatprep.subr.bf16.mxu0 0
      %355 = vmatpush1.bf16.msra.mxu0 0
      %356 = vmatprep.mubr.bf16.mxu0 0
      %357 = vmatmul.mubr.bf16.gmra.mrb[0].mxu0 %v309
      %v358 = vpop.f32.mrb[0].mxu0
      %v359 = vadd.f32 %v285, %v358
      %v360 = vpop.f32.mrb[0].mxu0
      %v361 = vpop.f32.mrb[0].mxu0
      %v362 = vadd.f32 %v285, %v361
      %v363 = vpop.f32.mrb[0].mxu0
      %364 = vmatprep.mubr.bf16.mxu0 0
      %365 = vmatmul.mubr.bf16.gmra.mrb[0].mxu0 %v312
      %v366 = vpop.f32.mrb[0].mxu0
      %v367 = vadd.f32 %v285, %v366
      %v368 = vpop.f32.mrb[0].mxu0
      %v369 = vpop.f32.mrb[0].mxu0
      %v370 = vadd.f32 %v285, %v369
      %v371 = vpop.f32.mrb[0].mxu0
      %372 = vmatprep.mubr.bf16.mxu0 0
      %373 = vmatmul.mubr.bf16.gmra.mrb[0].mxu0 %v315
      %v374 = vpop.f32.mrb[0].mxu0
      %v375 = vadd.f32 %v285, %v374
      %v376 = vpop.f32.mrb[0].mxu0
      %v377 = vpop.f32.mrb[0].mxu0
      %v378 = vadd.f32 %v285, %v377
      %v379 = vpop.f32.mrb[0].mxu0
      %380 = vmatprep.mubr.bf16.mxu0 0
      %381 = vmatmul.mubr.bf16.gmra.mrb[0].mxu0 %v318
      %v382 = vpop.f32.mrb[0].mxu0
      %v383 = vadd.f32 %v285, %v382
      %v384 = vpop.f32.mrb[0].mxu0
      %v385 = vpop.f32.mrb[0].mxu0
      %v386 = vadd.f32 %v285, %v385
      %v387 = vpop.f32.mrb[0].mxu0
      %388 = vdwg.mxu0
      %v389 = vpack.c.bf16 %v359, %v359
      %v390 = vpack.c.bf16 %v362, %v362
      %v391 = vpack.c.bf16 %v367, %v367
      %v392 = vpack.c.bf16 %v370, %v370
      %v393 = vpack.c.bf16 %v375, %v375
      %v394 = vpack.c.bf16 %v378, %v378
      %v395 = vpack.c.bf16 %v383, %v383
      %v396 = vpack.c.bf16 %v386, %v386
      %vm397 = vcmask 27648
      %398 = vst.msk [vmem:[%s172] sm:$0xf] %vm397, %v389
      %399 = vst.msk [vmem:[%s172 + $0x4] sm:$0xf] %vm397, %v390
      %400 = vst.msk [vmem:[%s172 + $0x8] sm:$0xf] %vm397, %v391
      %401 = vst.msk [vmem:[%s172 + $0xc] sm:$0xf] %vm397, %v392
      %402 = vst.msk [vmem:[%s172 + $0x10] sm:$0xf] %vm397, %v393
      %403 = vst.msk [vmem:[%s172 + $0x14] sm:$0xf] %vm397, %v394
      %404 = vst.msk [vmem:[%s172 + $0x18] sm:$0xf] %vm397, %v395
      %405 = vst.msk [vmem:[%s172 + $0x1c] sm:$0xf] %vm397, %v396
      %s406 = smul.u32 8, %s14
      %p407 = scmp.lt.s32.totalorder %s406, 15
      %s408 = scalar_select %p407, %s406, 15
      %s409 = smul.addr %s408, 4
      %s410 = scalar_lea.vmem %s3, %s409
      // Predicated region
      $region33: #{tpu_custom_call.1} parent=31 // pred_check
        %p411 = pneg %p100
      $region34: #{tpu_custom_call.1} parent=31 // pred_check_branch
        %413 = sbr.rel (%p411) target = $region36
      $region35: #{tpu_custom_call.1} parent=31 // pred_region
        %s414 = smul.u32 8, %s14
      $region36: #{tpu_custom_call.1} parent=31 // pred_fallthru
        _
    $region32: #{tpu_custom_call.1} parent=5 // pred_fallthru
      _
    %p415 = scmp.le.s32.totalorder 2, %s9
    // Predicated region
    $region37: #{tpu_custom_call.1} parent=5 // pred_check
      %p416 = pneg %p415
    $region38: #{tpu_custom_call.1} parent=5 // pred_check_branch
      %418 = sbr.rel (%p416) target = $region40
    $region39: #{tpu_custom_call.1} parent=5 // pred_region
      %s419 = ssub.s32 %s9, 2
      // Predicated region
      $region41: #{tpu_custom_call.1} parent=39 // pred_check
        %p420 = pneg %p106
      $region42: #{tpu_custom_call.1} parent=39 // pred_check_branch
        %422 = sbr.rel (%p420) target = $region44
      $region43: #{tpu_custom_call.1} parent=39 // pred_region
        %s423 = smul.u32 8, %s15
        %p424 = scmp.lt.s32.totalorder %s423, 15
        %s425 = scalar_select %p424, %s423, 15
        %s426 = smul.addr %s425, 4
        %s427 = scalar_lea.vmem %s3, %s426
      $region44: #{tpu_custom_call.1} parent=39 // pred_fallthru
        _
    $region40: #{tpu_custom_call.1} parent=5 // pred_fallthru
      _
  $region6: #{tpu_custom_call.1} parent=0 // loop_footer
    %s13 = sadd.s32 1, %s9
  $region7: #{tpu_custom_call.1} parent=0 // loop_footer_branch
    %8 = sbr.rel target = $region3
  $region8: #{tpu_custom_call.1} parent=0 // loop_exit
    _

</llo_original>
